<compile_context>
chip_gen: v5e
topology: v5e:2x2
jax: 0.10.0
libtpu: 0.0.40
codegen_flags: <defaults>
</compile_context>

<pallas_src>
import jax
import jax.numpy as jnp
from jax.experimental import pallas as pl
from jax.experimental.pallas import tpu as pltpu


# ------------------------------ Pallas kernel ------------------------------ #

def fused_graph_classifier_kernel(a_ref, h_ref, w_ref, b_ref,
                                  w1_ref, b1_ref, w2_ref, b2_ref, o_ref):
    """Fused: GNN layers -> concat+mean readout -> 2-layer classifier head.

    a_ref  : (N, N)       bf16  row-normalized adjacency (NO self loops; +I in-kernel)
    h_ref  : (N, DP)      bf16  zero-padded node features
    w_ref  : (L, DP, DP)  bf16  stacked, zero-padded GNN layer weights
    b_ref  : (L, 1, DP)   f32   stacked, zero-padded GNN layer biases
    w1_ref : (L, DP, HP)  bf16  head layer-1 weights, per-layer slice of the concat
    b1_ref : (1, HP)      f32
    w2_ref : (HP, C)      bf16  head layer-2 weights
    b2_ref : (1, C)       f32
    o_ref  : (1, C)       f32   graph logits
    """
    n = a_ref.shape[0]
    num_layers = w_ref.shape[0]
    inv_n = 1.0 / n                         # static node count -> exact mean

    a = a_ref[...]                          # (N, N) bf16
    h_bf = h_ref[...]                       # (N, DP) bf16
    h_f32 = h_bf.astype(jnp.float32)        # f32 copy for the in-kernel self-term

    # Head layer-1 pre-activation accumulator (replaces the emb scratch).
    z1 = b1_ref[...]                        # (1, HP) f32

    # Static unroll over layers (num_layers is small and compile-time constant).
    for l in range(num_layers):
        # message passing with GIN self-term folded in (A_hat = A_norm + I)
        agg = jnp.dot(a, h_bf, preferred_element_type=jnp.float32) + h_f32  # (N, DP)
        # dense transform + bias + ReLU
        z = jnp.dot(agg.astype(jnp.bfloat16), w_ref[l],
                    preferred_element_type=jnp.float32) + b_ref[l]          # (N, DP)
        h_f32 = jnp.maximum(z, 0.0)
        h_bf = h_f32.astype(jnp.bfloat16)
        # fused 'concat' + mean readout, folded straight into the head's first
        # Linear: z1 += mean_l @ W1[l]  (the concatenated embedding never exists)
        mean_l = jnp.sum(h_f32, axis=0, keepdims=True) * inv_n              # (1, DP)
        z1 = z1 + jnp.dot(mean_l.astype(jnp.bfloat16), w1_ref[l],
                          preferred_element_type=jnp.float32)               # (1, HP)

    # ClassifierHead epilogue: ReLU -> Linear
    z1 = jnp.maximum(z1, 0.0)
    o_ref[...] = jnp.dot(z1.astype(jnp.bfloat16), w2_ref[...],
                         preferred_element_type=jnp.float32) + b2_ref[...]


# --------------------------- One-time param packing ------------------------ #

_LANE = 128  # pad feature dims to full 128-lane vregs / MXU tiles


def _round_up(x, m):
    return ((x + m - 1) // m) * m


def _pad2(x, rows, cols):
    return jnp.pad(x, ((0, rows - x.shape[0]), (0, cols - x.shape[1])))


def prepare_params(gnn_params, head_params, d_in):
    """One-time packing of all weights into padded, stacked, bf16 form.

    Hoisted out of the per-call path: padding, stacking, the W1 concat-layout
    remap (now a single reshape->pad) and the bf16 casts happen exactly once.
    """
    num_layers = len(gnn_params)
    d_hid = gnn_params[0][0].shape[1]              # per-layer GNN output dim
    dp = _round_up(max(d_in, d_hid, _LANE), _LANE)

    w1, b1, w2, b2 = head_params
    latent, hid = w1.shape                          # latent = d_hid * num_layers
    nr_classes = w2.shape[1]
    hp = _round_up(max(hid, _LANE), _LANE)

    # stacked, zero-padded GNN layer params
    w_stack = jnp.stack([_pad2(w, dp, dp) for (w, _) in gnn_params]
                        ).astype(jnp.bfloat16)                      # (L, DP, DP)
    b_stack = jnp.stack([_pad2(b, 1, dp) for (_, b) in gnn_params]
                        ).astype(jnp.float32)                       # (L, 1, DP)

    # head layer 1: dense concat layout -> per-layer padded slices, via a
    # single reshape + pad (replaces the old L-iteration .at[].set loop)
    w1_stack = jnp.pad(
        w1.reshape(num_layers, d_hid, hid),
        ((0, 0), (0, dp - d_hid), (0, hp - hid))).astype(jnp.bfloat16)  # (L, DP, HP)
    b1_p = _pad2(b1, 1, hp).astype(jnp.float32)                     # (1, HP)
    w2_p = _pad2(w2, hp, nr_classes).astype(jnp.bfloat16)           # (HP, C)
    b2_p = b2.astype(jnp.float32)                                   # (1, C)

    return dict(
        w_stack=w_stack, b_stack=b_stack,
        w1_stack=w1_stack, b1_p=b1_p, w2_p=w2_p, b2_p=b2_p,
        num_layers=num_layers, dp=dp, hp=hp, nr_classes=nr_classes,
    )


# ------------------------------ Per-call wrapper ---------------------------- #

def graph_classifier_forward(a_norm, node_feats, packed):
    """Full GraphClassifier forward, fused into one pallas_call.

    Per-call work is only: cast A to bf16, pad/cast the node features, launch.
    """
    n = a_norm.shape[0]
    dp, hp = packed["dp"], packed["hp"]
    num_layers, nr_classes = packed["num_layers"], packed["nr_classes"]

    a_bf = a_norm.astype(jnp.bfloat16)                              # (N, N)
    h0_p = _pad2(node_feats, n, dp).astype(jnp.bfloat16)            # (N, DP)

    # ---- footprint / cost bookkeeping (Python ints, compile-time only) ----
    in_bytes = (n * n * 2 + n * dp * 2
                + num_layers * dp * dp * 2 + num_layers * dp * 4
                + num_layers * dp * hp * 2 + hp * 4
                + hp * nr_classes * 2 + nr_classes * 4)
    out_bytes = nr_classes * 4
    flops = (2 * num_layers * (n * n * dp + n * dp * dp)
             + 2 * (num_layers * dp * hp + hp * nr_classes))
    # actual resident footprint + compute headroom, clamped to v7x physical VMEM
    vmem_limit = int(min(64 * 2**20, max(32 * 2**20, 2 * in_bytes + 4 * 2**20)))

    vmem = pl.BlockSpec(memory_space=pltpu.MemorySpace.VMEM)
    return pl.pallas_call(
        fused_graph_classifier_kernel,
        out_shape=jax.ShapeDtypeStruct((1, nr_classes), jnp.float32),
        in_specs=[vmem] * 8,
        out_specs=vmem,
        compiler_params=pltpu.CompilerParams(vmem_limit_bytes=vmem_limit),
        cost_estimate=pl.CostEstimate(flops=flops, transcendentals=0,
                                      bytes_accessed=in_bytes + out_bytes),
    )(a_bf, h0_p, packed["w_stack"], packed["b_stack"],
      packed["w1_stack"], packed["b1_p"], packed["w2_p"], packed["b2_p"])


# ------------------------------- Param init -------------------------------- #

def init_linear(key, d_in, d_out):
    kw, kb = jax.random.split(key)
    bound = 1.0 / float(d_in) ** 0.5
    w = jax.random.uniform(kw, (d_in, d_out), jnp.float32, -bound, bound)
    b = jax.random.uniform(kb, (1, d_out), jnp.float32, -bound, bound)
    return w, b


if __name__ == "__main__":
    key = jax.random.PRNGKey(0)

    # small, shape-consistent config
    N = 32              # number of nodes (multiple of 8 -> no node padding)
    D_IN = 16           # input node feature dim (GNN_NODE_FEAT_IN)
    D_HID = 32          # gnn output_dim
    NUM_LAYERS = 2      # gnn num_layers
    NR_CLASSES = 4
    LATENT = D_HID * NUM_LAYERS   # readout_op = 'concat'

    k_feat, k_adj, k_g0, k_g1, k_h1, k_h2 = jax.random.split(key, 6)

    # node features
    node_feats = jax.random.normal(k_feat, (N, D_IN), jnp.float32)

    # deterministic random graph -> symmetric, row-normalized dense adjacency
    adj_logits = jax.random.uniform(k_adj, (N, N), jnp.float32)
    adj = (adj_logits < 0.2).astype(jnp.float32)
    adj = jnp.maximum(adj, adj.T)
    adj = adj * (1.0 - jnp.eye(N, dtype=jnp.float32))   # no self loops (self-term added in-kernel)
    deg = jnp.maximum(jnp.sum(adj, axis=1, keepdims=True), 1.0)
    a_norm = adj / deg

    # GNN layer params
    gnn_keys = [k_g0, k_g1]
    gnn_dims = [(D_IN, D_HID), (D_HID, D_HID)]
    gnn_params = [init_linear(k, di, do) for k, (di, do) in zip(gnn_keys, gnn_dims)]

    # ClassifierHead params (n_layers=2, hidden_dim defaults to input_dim=LATENT)
    w1, b1 = init_linear(k_h1, LATENT, LATENT)
    w2, b2 = init_linear(k_h2, LATENT, NR_CLASSES)
    head_params = (w1, b1, w2, b2)

    # one-time packing, then a jitted per-call path (cast+pad+launch only)
    packed = prepare_params(gnn_params, head_params, D_IN)
    packed = jax.tree_util.tree_map(
        lambda x: jax.block_until_ready(x) if isinstance(x, jnp.ndarray) else x, packed)
    fwd = jax.jit(lambda a, x: graph_classifier_forward(a, x, packed))

    graph_logit = fwd(a_norm, node_feats)
    graph_logit = jax.block_until_ready(graph_logit)

    assert graph_logit.shape == (1, NR_CLASSES)
    assert graph_logit.dtype == jnp.float32
    print("KERNEL_OK")
</pallas_src>

<mosaic_0001>
module attributes {stable_mosaic.version = 11 : i64} {
  func.func @fused_graph_classifier_kernel(%arg0: memref<32x32xbf16, #tpu.memory_space<vmem>>, %arg1: memref<32x128xbf16, #tpu.memory_space<vmem>>, %arg2: memref<2x128x128xbf16, #tpu.memory_space<vmem>>, %arg3: memref<2x1x128xf32, #tpu.memory_space<vmem>>, %arg4: memref<2x128x128xbf16, #tpu.memory_space<vmem>>, %arg5: memref<1x128xf32, #tpu.memory_space<vmem>>, %arg6: memref<128x4xbf16, #tpu.memory_space<vmem>>, %arg7: memref<1x4xf32, #tpu.memory_space<vmem>>, %arg8: memref<1x4xf32, #tpu.memory_space<vmem>>) attributes {dimension_semantics = [], scalar_prefetch = 0 : i64, scratch_operands = 0 : i64, tpu.core_type = #tpu.core_type<tc>} {
    %c0 = arith.constant 0 : index
    %c0_0 = arith.constant 0 : index
    %0 = vector.load %arg0[%c0, %c0_0] : memref<32x32xbf16, #tpu.memory_space<vmem>>, vector<32x32xbf16>
    %c0_1 = arith.constant 0 : index
    %c0_2 = arith.constant 0 : index
    %1 = vector.load %arg1[%c0_1, %c0_2] : memref<32x128xbf16, #tpu.memory_space<vmem>>, vector<32x128xbf16>
    %2 = arith.extf %1 : vector<32x128xbf16> to vector<32x128xf32>
    %c0_3 = arith.constant 0 : index
    %c0_4 = arith.constant 0 : index
    %3 = vector.load %arg5[%c0_3, %c0_4] : memref<1x128xf32, #tpu.memory_space<vmem>>, vector<1x128xf32>
    %cst = arith.constant dense<0.000000e+00> : vector<32x128xf32>
    %4 = tpu.matmul %0, %1, %cst {dimension_numbers = #tpu.dot_dimension_numbers<[1], [0], [0], [1], [0, 0, 1, 1], [], []>} : vector<32x32xbf16>, vector<32x128xbf16>, vector<32x128xf32> -> vector<32x128xf32>
    %5 = arith.addf %4, %2 : vector<32x128xf32>
    %6 = arith.truncf %5 : vector<32x128xf32> to vector<32x128xbf16>
    %c0_5 = arith.constant 0 : index
    %c0_6 = arith.constant 0 : index
    %c0_7 = arith.constant 0 : index
    %7 = vector.load %arg2[%c0_5, %c0_6, %c0_7] : memref<2x128x128xbf16, #tpu.memory_space<vmem>>, vector<1x128x128xbf16>
    %8 = vector.shape_cast %7 : vector<1x128x128xbf16> to vector<128x128xbf16>
    %cst_8 = arith.constant dense<0.000000e+00> : vector<32x128xf32>
    %9 = tpu.matmul %6, %8, %cst_8 {dimension_numbers = #tpu.dot_dimension_numbers<[1], [0], [0], [1], [0, 0, 1, 1], [], []>} : vector<32x128xbf16>, vector<128x128xbf16>, vector<32x128xf32> -> vector<32x128xf32>
    %c0_9 = arith.constant 0 : index
    %c0_10 = arith.constant 0 : index
    %c0_11 = arith.constant 0 : index
    %10 = vector.load %arg3[%c0_9, %c0_10, %c0_11] : memref<2x1x128xf32, #tpu.memory_space<vmem>>, vector<1x1x128xf32>
    %11 = vector.shape_cast %10 : vector<1x1x128xf32> to vector<1x128xf32>
    %12 = vector.broadcast %11 : vector<1x128xf32> to vector<32x128xf32>
    %13 = arith.addf %9, %12 : vector<32x128xf32>
    %cst_12 = arith.constant 0.000000e+00 : f32
    %14 = vector.broadcast %cst_12 : f32 to vector<32x128xf32>
    %15 = arith.maximumf %13, %14 : vector<32x128xf32>
    %16 = arith.truncf %15 : vector<32x128xf32> to vector<32x128xbf16>
    %cst_13 = arith.constant dense<0.000000e+00> : vector<128xf32>
    %17 = vector.multi_reduction <add>, %15, %cst_13 [0] : vector<32x128xf32> to vector<128xf32>
    %18 = vector.shape_cast %17 : vector<128xf32> to vector<1x128xf32>
    %cst_14 = arith.constant 3.125000e-02 : f32
    %19 = vector.broadcast %cst_14 : f32 to vector<1x128xf32>
    %20 = arith.mulf %18, %19 : vector<1x128xf32>
    %21 = arith.truncf %20 : vector<1x128xf32> to vector<1x128xbf16>
    %c0_15 = arith.constant 0 : index
    %c0_16 = arith.constant 0 : index
    %c0_17 = arith.constant 0 : index
    %22 = vector.load %arg4[%c0_15, %c0_16, %c0_17] : memref<2x128x128xbf16, #tpu.memory_space<vmem>>, vector<1x128x128xbf16>
    %23 = vector.shape_cast %22 : vector<1x128x128xbf16> to vector<128x128xbf16>
    %cst_18 = arith.constant dense<0.000000e+00> : vector<1x128xf32>
    %24 = tpu.matmul %21, %23, %cst_18 {dimension_numbers = #tpu.dot_dimension_numbers<[1], [0], [0], [1], [0, 0, 1, 1], [], []>} : vector<1x128xbf16>, vector<128x128xbf16>, vector<1x128xf32> -> vector<1x128xf32>
    %25 = arith.addf %3, %24 : vector<1x128xf32>
    %cst_19 = arith.constant dense<0.000000e+00> : vector<32x128xf32>
    %26 = tpu.matmul %0, %16, %cst_19 {dimension_numbers = #tpu.dot_dimension_numbers<[1], [0], [0], [1], [0, 0, 1, 1], [], []>} : vector<32x32xbf16>, vector<32x128xbf16>, vector<32x128xf32> -> vector<32x128xf32>
    %27 = arith.addf %26, %15 : vector<32x128xf32>
    %28 = arith.truncf %27 : vector<32x128xf32> to vector<32x128xbf16>
    %c1 = arith.constant 1 : index
    %c0_20 = arith.constant 0 : index
    %c0_21 = arith.constant 0 : index
    %29 = vector.load %arg2[%c1, %c0_20, %c0_21] : memref<2x128x128xbf16, #tpu.memory_space<vmem>>, vector<1x128x128xbf16>
    %30 = vector.shape_cast %29 : vector<1x128x128xbf16> to vector<128x128xbf16>
    %cst_22 = arith.constant dense<0.000000e+00> : vector<32x128xf32>
    %31 = tpu.matmul %28, %30, %cst_22 {dimension_numbers = #tpu.dot_dimension_numbers<[1], [0], [0], [1], [0, 0, 1, 1], [], []>} : vector<32x128xbf16>, vector<128x128xbf16>, vector<32x128xf32> -> vector<32x128xf32>
    %c1_23 = arith.constant 1 : index
    %c0_24 = arith.constant 0 : index
    %c0_25 = arith.constant 0 : index
    %32 = vector.load %arg3[%c1_23, %c0_24, %c0_25] : memref<2x1x128xf32, #tpu.memory_space<vmem>>, vector<1x1x128xf32>
    %33 = vector.shape_cast %32 : vector<1x1x128xf32> to vector<1x128xf32>
    %34 = vector.broadcast %33 : vector<1x128xf32> to vector<32x128xf32>
    %35 = arith.addf %31, %34 : vector<32x128xf32>
    %cst_26 = arith.constant 0.000000e+00 : f32
    %36 = vector.broadcast %cst_26 : f32 to vector<32x128xf32>
    %37 = arith.maximumf %35, %36 : vector<32x128xf32>
    %cst_27 = arith.constant dense<0.000000e+00> : vector<128xf32>
    %38 = vector.multi_reduction <add>, %37, %cst_27 [0] : vector<32x128xf32> to vector<128xf32>
    %39 = vector.shape_cast %38 : vector<128xf32> to vector<1x128xf32>
    %cst_28 = arith.constant 3.125000e-02 : f32
    %40 = vector.broadcast %cst_28 : f32 to vector<1x128xf32>
    %41 = arith.mulf %39, %40 : vector<1x128xf32>
    %42 = arith.truncf %41 : vector<1x128xf32> to vector<1x128xbf16>
    %c1_29 = arith.constant 1 : index
    %c0_30 = arith.constant 0 : index
    %c0_31 = arith.constant 0 : index
    %43 = vector.load %arg4[%c1_29, %c0_30, %c0_31] : memref<2x128x128xbf16, #tpu.memory_space<vmem>>, vector<1x128x128xbf16>
    %44 = vector.shape_cast %43 : vector<1x128x128xbf16> to vector<128x128xbf16>
    %cst_32 = arith.constant dense<0.000000e+00> : vector<1x128xf32>
    %45 = tpu.matmul %42, %44, %cst_32 {dimension_numbers = #tpu.dot_dimension_numbers<[1], [0], [0], [1], [0, 0, 1, 1], [], []>} : vector<1x128xbf16>, vector<128x128xbf16>, vector<1x128xf32> -> vector<1x128xf32>
    %46 = arith.addf %25, %45 : vector<1x128xf32>
    %cst_33 = arith.constant 0.000000e+00 : f32
    %47 = vector.broadcast %cst_33 : f32 to vector<1x128xf32>
    %48 = arith.maximumf %46, %47 : vector<1x128xf32>
    %49 = arith.truncf %48 : vector<1x128xf32> to vector<1x128xbf16>
    %c0_34 = arith.constant 0 : index
    %c0_35 = arith.constant 0 : index
    %50 = vector.load %arg6[%c0_34, %c0_35] : memref<128x4xbf16, #tpu.memory_space<vmem>>, vector<128x4xbf16>
    %cst_36 = arith.constant dense<0.000000e+00> : vector<1x4xf32>
    %51 = tpu.matmul %49, %50, %cst_36 {dimension_numbers = #tpu.dot_dimension_numbers<[1], [0], [0], [1], [0, 0, 1, 1], [], []>} : vector<1x128xbf16>, vector<128x4xbf16>, vector<1x4xf32> -> vector<1x4xf32>
    %c0_37 = arith.constant 0 : index
    %c0_38 = arith.constant 0 : index
    %52 = vector.load %arg7[%c0_37, %c0_38] : memref<1x4xf32, #tpu.memory_space<vmem>>, vector<1x4xf32>
    %53 = arith.addf %51, %52 : vector<1x4xf32>
    %c0_39 = arith.constant 0 : index
    %c0_40 = arith.constant 0 : index
    %54 = vector.load %arg8[%c0_39, %c0_40] : memref<1x4xf32, #tpu.memory_space<vmem>>, vector<1x4xf32>
    tpu.vector_store %arg8[%c0_39, %c0_40], %53 {strides = array<i32>} : memref<1x4xf32, #tpu.memory_space<vmem>>, vector<1x4xf32>,
    return
  }
}

</mosaic_0001>

<llo_original>
// kernel: _lambda_.1
$region0: #{_lambda_.1}
  #allocation0 [shape = 'u32[]', space=smem, size = 0x4, offset = 0x4, fixed_abs, tag = 'smem constant byte address 0x4 - core index']
  #allocation1 [shape = 'u32[72,128]{1,0:T(1,128)}', space=vmem, size = 0x9000, scoped, tag = 'internal scratch']
  %s0 = inlined_call_operand.vmem [shape: bf16[32,32], index: 0, kind: input, shape index: {}]
  %s1 = inlined_call_operand.vmem [shape: bf16[32,128], index: 1, kind: input, shape index: {}]
  %s2 = inlined_call_operand.hbm [shape: bf16[2,128,128], index: 2, kind: input, shape index: {}]
  %s3 = inlined_call_operand.vmem [shape: f32[2,1,128], index: 3, kind: input, shape index: {}]
  %s4 = inlined_call_operand.vmem [shape: bf16[2,128,128], index: 4, kind: input, shape index: {}]
  %s5 = inlined_call_operand.vmem [shape: f32[1,128], index: 5, kind: input, shape index: {}]
  %s6 = inlined_call_operand.hbm [shape: bf16[128,4], index: 6, kind: input, shape index: {}]
  %s7 = inlined_call_operand.vmem [shape: f32[1,4], index: 7, kind: input, shape index: {}]
  %s8 = inlined_call_operand.hbm [shape: f32[1,4], index: 8, kind: output, shape index: {}]
  %s9 = sld [smem:[#allocation0]]
  $region50: #{_lambda_.1} parent=0
    _
  %s11 = ssub.s32 1, %s9
  %s12 = scalar_select 0, %s11, %s9
  $region1: #{_lambda_.1} parent=0
    #allocation2 [shape = 'u8[65536]{0}', space=vmem, size = 0x10000, scoped, tag = 'input window, operand 2, single buffered']
    #allocation3 [shape = 's32[1]{0}', space=sflag, size = 0x4, scoped, tag = 'scoped memory for _lambda_.1']
    #allocation4 [shape = 's32[1]{0}', space=sflag, size = 0x4, scoped, tag = 'scoped memory for _lambda_.1']
    #allocation5 [shape = 'u8[32768]{0}', space=vmem, size = 0x8000, scoped, tag = 'input window, operand 6, single buffered']
    #allocation6 [shape = 's32[1]{0}', space=sflag, size = 0x4, scoped, tag = 'scoped memory for _lambda_.1']
    #allocation7 [shape = 'u8[512]{0}', space=vmem, size = 0x400, scoped, tag = 'output window, operand 0, single buffered']
    %13 = vsyncpa [#allocation3], 0
    %14 = vsyncpa [#allocation6], 0
    %15 = vsyncpa [#allocation4], 0
    // Predicated region
    $region2: #{_lambda_.1} parent=1 // pred_check
      _
    $region3: #{_lambda_.1} parent=1 // pred_check_branch
      %17 = sbr.rel (0) target = $region5
    $region4: #{_lambda_.1} parent=1 // pred_region
      _
    $region5: #{_lambda_.1} parent=1 // pred_fallthru
      _
    // Predicated region
    $region6: #{_lambda_.1} parent=1 // pred_check
      _
    $region7: #{_lambda_.1} parent=1 // pred_check_branch
      %19 = sbr.rel (0) target = $region9
    $region8: #{_lambda_.1} parent=1 // pred_region
      _
    $region9: #{_lambda_.1} parent=1 // pred_fallthru
      _
    // Predicated region
    $region10: #{_lambda_.1} parent=1 // pred_check
      _
    $region11: #{_lambda_.1} parent=1 // pred_check_branch
      %21 = sbr.rel (0) target = $region13
    $region12: #{_lambda_.1} parent=1 // pred_region
      %23 = vsyncadd [#allocation3], 0
      %s24 = sshll.u32 %s2, 4
      %s25 = int_to_ptr.hbm [resolvable:$true] %s24
      %s26 = sshll.u32 [#allocation2], 4
      %s27 = int_to_ptr.vmem [resolvable:$true] %s26
      %32 = dma.hbm_to_vmem [thread:$0]  %s25, 2048, %s27, [#allocation3], 64, 64, 4
    $region13: #{_lambda_.1} parent=1 // pred_fallthru
      _
    // Predicated region
    $region14: #{_lambda_.1} parent=1 // pred_check
      _
    $region15: #{_lambda_.1} parent=1 // pred_check_branch
      %34 = sbr.rel (0) target = $region17
    $region16: #{_lambda_.1} parent=1 // pred_region
      _
    $region17: #{_lambda_.1} parent=1 // pred_fallthru
      _
    // Predicated region
    $region18: #{_lambda_.1} parent=1 // pred_check
      _
    $region19: #{_lambda_.1} parent=1 // pred_check_branch
      %36 = sbr.rel (0) target = $region21
    $region20: #{_lambda_.1} parent=1 // pred_region
      _
    $region21: #{_lambda_.1} parent=1 // pred_fallthru
      _
    // Predicated region
    $region22: #{_lambda_.1} parent=1 // pred_check
      _
    $region23: #{_lambda_.1} parent=1 // pred_check_branch
      %38 = sbr.rel (0) target = $region25
    $region24: #{_lambda_.1} parent=1 // pred_region
      _
    $region25: #{_lambda_.1} parent=1 // pred_fallthru
      _
    // Predicated region
    $region26: #{_lambda_.1} parent=1 // pred_check
      _
    $region27: #{_lambda_.1} parent=1 // pred_check_branch
      %40 = sbr.rel (0) target = $region29
    $region28: #{_lambda_.1} parent=1 // pred_region
      %42 = vsyncadd [#allocation6], 0
      %s43 = sshll.u32 %s6, 4
      %s44 = int_to_ptr.hbm [resolvable:$true] %s43
      %s45 = sshll.u32 [#allocation5], 4
      %s46 = int_to_ptr.vmem [resolvable:$true] %s45
      %51 = dma.hbm_to_vmem [thread:$0]  %s44, 1024, %s46, [#allocation6], 64, 64, 4
    $region29: #{_lambda_.1} parent=1 // pred_fallthru
      _
    // Predicated region
    $region30: #{_lambda_.1} parent=1 // pred_check
      _
    $region31: #{_lambda_.1} parent=1 // pred_check_branch
      %53 = sbr.rel (0) target = $region33
    $region32: #{_lambda_.1} parent=1 // pred_region
      _
    $region33: #{_lambda_.1} parent=1 // pred_fallthru
      _
    // Predicated region
    $region34: #{_lambda_.1} parent=1 // pred_check
      _
    $region35: #{_lambda_.1} parent=1 // pred_check_branch
      %55 = sbr.rel (0) target = $region37
    $region36: #{_lambda_.1} parent=1 // pred_region
      %57 = dma.done [#allocation3], 2048
    $region37: #{_lambda_.1} parent=1 // pred_fallthru
      _
    // Predicated region
    $region38: #{_lambda_.1} parent=1 // pred_check
      _
    $region39: #{_lambda_.1} parent=1 // pred_check_branch
      %59 = sbr.rel (0) target = $region41
    $region40: #{_lambda_.1} parent=1 // pred_region
      %61 = dma.done [#allocation6], 1024
    $region41: #{_lambda_.1} parent=1 // pred_fallthru
      _
    %v63 = vld [vmem:[%s0] sm:$0xf]
    %v64 = vld [vmem:[%s0 + $0x4] sm:$0xf]
    %v65 = vld [vmem:[%s0 + $0x8] sm:$0xf]
    %v66 = vld [vmem:[%s0 + $0xc] sm:$0xf]
    %v67 = vld [vmem:[%s1] sm:$0xf]
    %v68 = vld [vmem:[%s1 + $0x4] sm:$0xf]
    %v69 = vld [vmem:[%s1 + $0x8] sm:$0xf]
    %v70 = vld [vmem:[%s1 + $0xc] sm:$0xf]
    %v71 = vunpack.c.l.bf16 %v67
    %v72 = vunpack.c.l.bf16 %v68
    %v73 = vunpack.c.l.bf16 %v69
    %v74 = vunpack.c.l.bf16 %v70
    %v75 = vld [vmem:[%s5] sm:$0x1]
    %v80 = vunpack.c.l.b16 %v63
    %v81 = vunpack.c.l.b16 %v64
    %v82 = vunpack.c.l.b16 %v65
    %v83 = vunpack.c.l.b16 %v66
    %v84 = vpack.c.b16 %v81, %v80
    %v85 = vpack.c.b16 %v83, %v82
    %v90 = vunpack.c.l.b16 %v67
    %v91 = vunpack.c.l.b16 %v68
    %v92 = vunpack.c.l.b16 %v69
    %v93 = vunpack.c.l.b16 %v70
    %v94 = vpack.c.b16 %v91, %v90
    %v95 = vpack.c.b16 %v93, %v92
    %vm98 = vcmask 261120
    %v100 = vsel %vm98, %v84, 0
    %v103 = vsel %vm98, %v85, 0
    %105 = vmatpush.bf16.msra.mxu0 0
    %106 = vmatpush.bf16.msra.mxu0 0
    %107 = vmatpush.bf16.msra.mxu0 0
    %108 = vmatpush.bf16.msra.mxu0 0
    %109 = vmatpush.bf16.msra.mxu0 0
    %110 = vmatpush.bf16.msra.mxu0 0
    %111 = vmatpush.bf16.msra.mxu0 %v95
    %112 = vmatpush.bf16.msra.mxu0 %v94
    %113 = vmatmul.bf16.gmra.mxu0 %v100
    %v114 = vpop.f32.mrf.mxu0
    %v115 = vadd.f32 %v71, %v114
    %v116 = vpop.f32.mrf.mxu0
    %v117 = vadd.f32 %v72, %v116
    %118 = vmatmul.bf16.gmra.mxu0 %v103
    %v119 = vpop.f32.mrf.mxu0
    %v120 = vadd.f32 %v73, %v119
    %v121 = vpop.f32.mrf.mxu0
    %v122 = vadd.f32 %v74, %v121
    %123 = vdwg.mxu0
    %v124 = vpack.c.bf16 %v117, %v115
    %v125 = vpack.c.bf16 %v122, %v120
    %v126 = vld [vmem:[#allocation2] sm:$0xf]
    %v127 = vld [vmem:[#allocation2 + $0x4] sm:$0xf]
    %v128 = vld [vmem:[#allocation2 + $0x8] sm:$0xf]
    %v129 = vld [vmem:[#allocation2 + $0xc] sm:$0xf]
    %v130 = vld [vmem:[#allocation2 + $0x10] sm:$0xf]
    %v131 = vld [vmem:[#allocation2 + $0x14] sm:$0xf]
    %v132 = vld [vmem:[#allocation2 + $0x18] sm:$0xf]
    %v133 = vld [vmem:[#allocation2 + $0x1c] sm:$0xf]
    %v134 = vld [vmem:[#allocation2 + $0x20] sm:$0xf]
    %v135 = vld [vmem:[#allocation2 + $0x24] sm:$0xf]
    %v136 = vld [vmem:[#allocation2 + $0x28] sm:$0xf]
    %v137 = vld [vmem:[#allocation2 + $0x2c] sm:$0xf]
    %v138 = vld [vmem:[#allocation2 + $0x30] sm:$0xf]
    %v139 = vld [vmem:[#allocation2 + $0x34] sm:$0xf]
    %v140 = vld [vmem:[#allocation2 + $0x38] sm:$0xf]
    %v141 = vld [vmem:[#allocation2 + $0x3c] sm:$0xf]
    %v142 = vld [vmem:[%s3] sm:$0x1]
    %v144 = vperm.slane %v142, 0
    %v162 = vunpack.c.l.b16 %v126
    %v163 = vunpack.c.l.b16 %v127
    %v164 = vunpack.c.l.b16 %v128
    %v165 = vunpack.c.l.b16 %v129
    %v166 = vunpack.c.l.b16 %v130
    %v167 = vunpack.c.l.b16 %v131
    %v168 = vunpack.c.l.b16 %v132
    %v169 = vunpack.c.l.b16 %v133
    %v170 = vunpack.c.l.b16 %v134
    %v171 = vunpack.c.l.b16 %v135
    %v172 = vunpack.c.l.b16 %v136
    %v173 = vunpack.c.l.b16 %v137
    %v174 = vunpack.c.l.b16 %v138
    %v175 = vunpack.c.l.b16 %v139
    %v176 = vunpack.c.l.b16 %v140
    %v177 = vunpack.c.l.b16 %v141
    %v178 = vpack.c.b16 %v163, %v162
    %v179 = vpack.c.b16 %v165, %v164
    %v180 = vpack.c.b16 %v167, %v166
    %v181 = vpack.c.b16 %v169, %v168
    %v182 = vpack.c.b16 %v171, %v170
    %v183 = vpack.c.b16 %v173, %v172
    %v184 = vpack.c.b16 %v175, %v174
    %v185 = vpack.c.b16 %v177, %v176
    %194 = vmatpush.bf16.msra.mxu0 %v185
    %195 = vmatpush.bf16.msra.mxu0 %v184
    %196 = vmatpush.bf16.msra.mxu0 %v183
    %197 = vmatpush.bf16.msra.mxu0 %v182
    %198 = vmatpush.bf16.msra.mxu0 %v181
    %199 = vmatpush.bf16.msra.mxu0 %v180
    %200 = vmatpush.bf16.msra.mxu0 %v179
    %201 = vmatpush.bf16.msra.mxu0 %v178
    %202 = vmatmul.bf16.gmra.mxu0 %v124
    %v203 = vpop.f32.mrf.mxu0
    %v204 = vadd.f32 %v144, %v203
    %v205 = vpop.f32.mrf.mxu0
    %v206 = vadd.f32 %v144, %v205
    %207 = vmatmul.bf16.gmra.mxu0 %v125
    %v208 = vpop.f32.mrf.mxu0
    %v209 = vadd.f32 %v144, %v208
    %v210 = vpop.f32.mrf.mxu0
    %v211 = vadd.f32 %v144, %v210
    %212 = vdwg.mxu0
    %v213 = vmax.f32 %v204, 0.0
    %v214 = vmax.f32 %v206, 0.0
    %v215 = vmax.f32 %v209, 0.0
    %v216 = vmax.f32 %v211, 0.0
    %v217 = vpack.c.bf16 %v214, %v213
    %v218 = vpack.c.bf16 %v216, %v215
    %v219 = vadd.f32 %v213, %v214
    %v220 = vadd.f32 %v219, %v215
    %v221 = vadd.f32 %v220, %v216
    %v222 = vrot.slane %v221, 4
    %v223 = vadd.f32 %v221, %v222
    %v224 = vrot.slane %v223, 2
    %v225 = vadd.f32 %v223, %v224
    %v226 = vrot.slane %v225, 1
    %v227 = vadd.f32 %v225, %v226
    %v228 = vmul.f32 %v227, 0.03125
    %v229 = vpack.c.bf16 %v228, %v228
    %v230 = vld [vmem:[%s4] sm:$0xf]
    %v231 = vld [vmem:[%s4 + $0x4] sm:$0xf]
    %v232 = vld [vmem:[%s4 + $0x8] sm:$0xf]
    %v233 = vld [vmem:[%s4 + $0xc] sm:$0xf]
    %v234 = vld [vmem:[%s4 + $0x10] sm:$0xf]
    %v235 = vld [vmem:[%s4 + $0x14] sm:$0xf]
    %v236 = vld [vmem:[%s4 + $0x18] sm:$0xf]
    %v237 = vld [vmem:[%s4 + $0x1c] sm:$0xf]
    %v238 = vld [vmem:[%s4 + $0x20] sm:$0xf]
    %v239 = vld [vmem:[%s4 + $0x24] sm:$0xf]
    %v240 = vld [vmem:[%s4 + $0x28] sm:$0xf]
    %v241 = vld [vmem:[%s4 + $0x2c] sm:$0xf]
    %v242 = vld [vmem:[%s4 + $0x30] sm:$0xf]
    %v243 = vld [vmem:[%s4 + $0x34] sm:$0xf]
    %v244 = vld [vmem:[%s4 + $0x38] sm:$0xf]
    %v245 = vld [vmem:[%s4 + $0x3c] sm:$0xf]
    %v262 = vunpack.c.l.b16 %v230
    %v263 = vunpack.c.l.b16 %v231
    %v264 = vunpack.c.l.b16 %v232
    %v265 = vunpack.c.l.b16 %v233
    %v266 = vunpack.c.l.b16 %v234
    %v267 = vunpack.c.l.b16 %v235
    %v268 = vunpack.c.l.b16 %v236
    %v269 = vunpack.c.l.b16 %v237
    %v270 = vunpack.c.l.b16 %v238
    %v271 = vunpack.c.l.b16 %v239
    %v272 = vunpack.c.l.b16 %v240
    %v273 = vunpack.c.l.b16 %v241
    %v274 = vunpack.c.l.b16 %v242
    %v275 = vunpack.c.l.b16 %v243
    %v276 = vunpack.c.l.b16 %v244
    %v277 = vunpack.c.l.b16 %v245
    %v278 = vpack.c.b16 %v263, %v262
    %v279 = vpack.c.b16 %v265, %v264
    %v280 = vpack.c.b16 %v267, %v266
    %v281 = vpack.c.b16 %v269, %v268
    %v282 = vpack.c.b16 %v271, %v270
    %v283 = vpack.c.b16 %v273, %v272
    %v284 = vpack.c.b16 %v275, %v274
    %v285 = vpack.c.b16 %v277, %v276
    %294 = vmatpush.bf16.msra.mxu0 %v285
    %295 = vmatpush.bf16.msra.mxu0 %v284
    %296 = vmatpush.bf16.msra.mxu0 %v283
    %297 = vmatpush.bf16.msra.mxu0 %v282
    %298 = vmatpush.bf16.msra.mxu0 %v281
    %299 = vmatpush.bf16.msra.mxu0 %v280
    %300 = vmatpush.bf16.msra.mxu0 %v279
    %301 = vmatpush.bf16.msra.mxu0 %v278
    %302 = vmatmul.bf16.gmra.mxu0 %v229
    %v303 = vpop.f32.mrf.mxu0
    %v304 = vadd.f32 0.0, %v303
    %v305 = vpop.f32.mrf.mxu0
    %306 = vdwg.mxu0
    %v307 = vadd.f32 %v75, %v304
    %308 = vmatpush.bf16.msra.mxu0 0
    %309 = vmatpush.bf16.msra.mxu0 0
    %310 = vmatpush.bf16.msra.mxu0 0
    %311 = vmatpush.bf16.msra.mxu0 0
    %312 = vmatpush.bf16.msra.mxu0 0
    %313 = vmatpush.bf16.msra.mxu0 0
    %314 = vmatpush.bf16.msra.mxu0 %v218
    %315 = vmatpush.bf16.msra.mxu0 %v217
    %316 = vmatmul.bf16.gmra.mxu0 %v100
    %v317 = vpop.f32.mrf.mxu0
    %v318 = vadd.f32 %v213, %v317
    %v319 = vpop.f32.mrf.mxu0
    %v320 = vadd.f32 %v214, %v319
    %321 = vmatmul.bf16.gmra.mxu0 %v103
    %v322 = vpop.f32.mrf.mxu0
    %v323 = vadd.f32 %v215, %v322
    %v324 = vpop.f32.mrf.mxu0
    %v325 = vadd.f32 %v216, %v324
    %326 = vdwg.mxu0
    %v327 = vpack.c.bf16 %v320, %v318
    %v328 = vpack.c.bf16 %v325, %v323
    %s329 = scalar_lea.vmem [#allocation2], 64
    %v330 = vld [vmem:[%s329] sm:$0xf]
    %v331 = vld [vmem:[%s329 + $0x4] sm:$0xf]
    %v332 = vld [vmem:[%s329 + $0x8] sm:$0xf]
    %v333 = vld [vmem:[%s329 + $0xc] sm:$0xf]
    %v334 = vld [vmem:[%s329 + $0x10] sm:$0xf]
    %v335 = vld [vmem:[%s329 + $0x14] sm:$0xf]
    %v336 = vld [vmem:[%s329 + $0x18] sm:$0xf]
    %v337 = vld [vmem:[%s329 + $0x1c] sm:$0xf]
    %v338 = vld [vmem:[%s329 + $0x20] sm:$0xf]
    %v339 = vld [vmem:[%s329 + $0x24] sm:$0xf]
    %v340 = vld [vmem:[%s329 + $0x28] sm:$0xf]
    %v341 = vld [vmem:[%s329 + $0x2c] sm:$0xf]
    %v342 = vld [vmem:[%s329 + $0x30] sm:$0xf]
    %v343 = vld [vmem:[%s329 + $0x34] sm:$0xf]
    %v344 = vld [vmem:[%s329 + $0x38] sm:$0xf]
    %v345 = vld [vmem:[%s329 + $0x3c] sm:$0xf]
    %s346 = scalar_lea.vmem %s3, 1
    %v347 = vld [vmem:[%s346] sm:$0x1]
    %v349 = vperm.slane %v347, 0
    %v367 = vunpack.c.l.b16 %v330
    %v368 = vunpack.c.l.b16 %v331
    %v369 = vunpack.c.l.b16 %v332
    %v370 = vunpack.c.l.b16 %v333
    %v371 = vunpack.c.l.b16 %v334
    %v372 = vunpack.c.l.b16 %v335
    %v373 = vunpack.c.l.b16 %v336
    %v374 = vunpack.c.l.b16 %v337
    %v375 = vunpack.c.l.b16 %v338
    %v376 = vunpack.c.l.b16 %v339
    %v377 = vunpack.c.l.b16 %v340
    %v378 = vunpack.c.l.b16 %v341
    %v379 = vunpack.c.l.b16 %v342
    %v380 = vunpack.c.l.b16 %v343
    %v381 = vunpack.c.l.b16 %v344
    %v382 = vunpack.c.l.b16 %v345
    %v383 = vpack.c.b16 %v368, %v367
    %v384 = vpack.c.b16 %v370, %v369
    %v385 = vpack.c.b16 %v372, %v371
    %v386 = vpack.c.b16 %v374, %v373
    %v387 = vpack.c.b16 %v376, %v375
    %v388 = vpack.c.b16 %v378, %v377
    %v389 = vpack.c.b16 %v380, %v379
    %v390 = vpack.c.b16 %v382, %v381
    %399 = vmatpush.bf16.msra.mxu0 %v390
    %400 = vmatpush.bf16.msra.mxu0 %v389
    %401 = vmatpush.bf16.msra.mxu0 %v388
    %402 = vmatpush.bf16.msra.mxu0 %v387
    %403 = vmatpush.bf16.msra.mxu0 %v386
    %404 = vmatpush.bf16.msra.mxu0 %v385
    %405 = vmatpush.bf16.msra.mxu0 %v384
    %406 = vmatpush.bf16.msra.mxu0 %v383
    %407 = vmatmul.bf16.gmra.mxu0 %v327
    %v408 = vpop.f32.mrf.mxu0
    %v409 = vadd.f32 %v349, %v408
    %v410 = vpop.f32.mrf.mxu0
    %v411 = vadd.f32 %v349, %v410
    %412 = vmatmul.bf16.gmra.mxu0 %v328
    %v413 = vpop.f32.mrf.mxu0
    %v414 = vadd.f32 %v349, %v413
    %v415 = vpop.f32.mrf.mxu0
    %v416 = vadd.f32 %v349, %v415
    %417 = vdwg.mxu0
    %v418 = vmax.f32 %v409, 0.0
    %v419 = vmax.f32 %v411, 0.0
    %v420 = vmax.f32 %v414, 0.0
    %v421 = vmax.f32 %v416, 0.0
    %v422 = vadd.f32 %v418, %v419
    %v423 = vadd.f32 %v422, %v420
    %v424 = vadd.f32 %v423, %v421
    %v425 = vrot.slane %v424, 4
    %v426 = vadd.f32 %v424, %v425
    %v427 = vrot.slane %v426, 2
    %v428 = vadd.f32 %v426, %v427
    %v429 = vrot.slane %v428, 1
    %v430 = vadd.f32 %v428, %v429
    %v431 = vmul.f32 %v430, 0.03125
    %v432 = vpack.c.bf16 %v431, %v431
    %s433 = scalar_lea.vmem %s4, 64
    %v434 = vld [vmem:[%s433] sm:$0xf]
    %v435 = vld [vmem:[%s433 + $0x4] sm:$0xf]
    %v436 = vld [vmem:[%s433 + $0x8] sm:$0xf]
    %v437 = vld [vmem:[%s433 + $0xc] sm:$0xf]
    %v438 = vld [vmem:[%s433 + $0x10] sm:$0xf]
    %v439 = vld [vmem:[%s433 + $0x14] sm:$0xf]
    %v440 = vld [vmem:[%s433 + $0x18] sm:$0xf]
    %v441 = vld [vmem:[%s433 + $0x1c] sm:$0xf]
    %v442 = vld [vmem:[%s433 + $0x20] sm:$0xf]
    %v443 = vld [vmem:[%s433 + $0x24] sm:$0xf]
    %v444 = vld [vmem:[%s433 + $0x28] sm:$0xf]
    %v445 = vld [vmem:[%s433 + $0x2c] sm:$0xf]
    %v446 = vld [vmem:[%s433 + $0x30] sm:$0xf]
    %v447 = vld [vmem:[%s433 + $0x34] sm:$0xf]
    %v448 = vld [vmem:[%s433 + $0x38] sm:$0xf]
    %v449 = vld [vmem:[%s433 + $0x3c] sm:$0xf]
    %v466 = vunpack.c.l.b16 %v434
    %v467 = vunpack.c.l.b16 %v435
    %v468 = vunpack.c.l.b16 %v436
    %v469 = vunpack.c.l.b16 %v437
    %v470 = vunpack.c.l.b16 %v438
    %v471 = vunpack.c.l.b16 %v439
    %v472 = vunpack.c.l.b16 %v440
    %v473 = vunpack.c.l.b16 %v441
    %v474 = vunpack.c.l.b16 %v442
    %v475 = vunpack.c.l.b16 %v443
    %v476 = vunpack.c.l.b16 %v444
    %v477 = vunpack.c.l.b16 %v445
    %v478 = vunpack.c.l.b16 %v446
    %v479 = vunpack.c.l.b16 %v447
    %v480 = vunpack.c.l.b16 %v448
    %v481 = vunpack.c.l.b16 %v449
    %v482 = vpack.c.b16 %v467, %v466
    %v483 = vpack.c.b16 %v469, %v468
    %v484 = vpack.c.b16 %v471, %v470
    %v485 = vpack.c.b16 %v473, %v472
    %v486 = vpack.c.b16 %v475, %v474
    %v487 = vpack.c.b16 %v477, %v476
    %v488 = vpack.c.b16 %v479, %v478
    %v489 = vpack.c.b16 %v481, %v480
    %498 = vmatpush.bf16.msra.mxu0 %v489
    %499 = vmatpush.bf16.msra.mxu0 %v488
    %500 = vmatpush.bf16.msra.mxu0 %v487
    %501 = vmatpush.bf16.msra.mxu0 %v486
    %502 = vmatpush.bf16.msra.mxu0 %v485
    %503 = vmatpush.bf16.msra.mxu0 %v484
    %504 = vmatpush.bf16.msra.mxu0 %v483
    %505 = vmatpush.bf16.msra.mxu0 %v482
    %506 = vmatmul.bf16.gmra.mxu0 %v432
    %v507 = vpop.f32.mrf.mxu0
    %v508 = vadd.f32 0.0, %v507
    %v509 = vpop.f32.mrf.mxu0
    %510 = vdwg.mxu0
    %v511 = vadd.f32 %v307, %v508
    %v512 = vmax.f32 %v511, 0.0
    %v513 = vpack.c.bf16 %v512, %v512
    %v514 = vld [vmem:[#allocation5] sm:$0xf]
    %v515 = vld [vmem:[#allocation5 + $0x4] sm:$0xf]
    %v516 = vld [vmem:[#allocation5 + $0x8] sm:$0xf]
    %v517 = vld [vmem:[#allocation5 + $0xc] sm:$0xf]
    %v518 = vld [vmem:[#allocation5 + $0x10] sm:$0xf]
    %v519 = vld [vmem:[#allocation5 + $0x14] sm:$0xf]
    %v520 = vld [vmem:[#allocation5 + $0x18] sm:$0xf]
    %v521 = vld [vmem:[#allocation5 + $0x1c] sm:$0xf]
    %v522 = vld [vmem:[#allocation5 + $0x20] sm:$0xf]
    %v523 = vld [vmem:[#allocation5 + $0x24] sm:$0xf]
    %v524 = vld [vmem:[#allocation5 + $0x28] sm:$0xf]
    %v525 = vld [vmem:[#allocation5 + $0x2c] sm:$0xf]
    %v526 = vld [vmem:[#allocation5 + $0x30] sm:$0xf]
    %v527 = vld [vmem:[#allocation5 + $0x34] sm:$0xf]
    %v528 = vld [vmem:[#allocation5 + $0x38] sm:$0xf]
    %v529 = vld [vmem:[#allocation5 + $0x3c] sm:$0xf]
    %v530 = vld [vmem:[%s7] sm:$0x1]
    %v547 = vunpack.c.l.b16 %v514
    %v548 = vunpack.c.l.b16 %v515
    %v549 = vunpack.c.l.b16 %v516
    %v550 = vunpack.c.l.b16 %v517
    %v551 = vunpack.c.l.b16 %v518
    %v552 = vunpack.c.l.b16 %v519
    %v553 = vunpack.c.l.b16 %v520
    %v554 = vunpack.c.l.b16 %v521
    %v555 = vunpack.c.l.b16 %v522
    %v556 = vunpack.c.l.b16 %v523
    %v557 = vunpack.c.l.b16 %v524
    %v558 = vunpack.c.l.b16 %v525
    %v559 = vunpack.c.l.b16 %v526
    %v560 = vunpack.c.l.b16 %v527
    %v561 = vunpack.c.l.b16 %v528
    %v562 = vunpack.c.l.b16 %v529
    %v563 = vpack.c.b16 %v548, %v547
    %v564 = vpack.c.b16 %v550, %v549
    %v565 = vpack.c.b16 %v552, %v551
    %v566 = vpack.c.b16 %v554, %v553
    %v567 = vpack.c.b16 %v556, %v555
    %v568 = vpack.c.b16 %v558, %v557
    %v569 = vpack.c.b16 %v560, %v559
    %v570 = vpack.c.b16 %v562, %v561
    %579 = vmatpush.bf16.msra.mxu0 %v570
    %580 = vmatpush.bf16.msra.mxu0 %v569
    %581 = vmatpush.bf16.msra.mxu0 %v568
    %582 = vmatpush.bf16.msra.mxu0 %v567
    %583 = vmatpush.bf16.msra.mxu0 %v566
    %584 = vmatpush.bf16.msra.mxu0 %v565
    %585 = vmatpush.bf16.msra.mxu0 %v564
    %586 = vmatpush.bf16.msra.mxu0 %v563
    %587 = vmatmul.bf16.gmra.mxu0 %v513
    %v588 = vpop.f32.mrf.mxu0
    %v589 = vadd.f32 %v530, %v588
    %v590 = vpop.f32.mrf.mxu0
    %591 = vdwg.mxu0
    %vm592 = vcmask 24576
    %593 = vst.msk [vmem:[#allocation7] sm:$0x1] %vm592, %v589
    // Predicated region
    $region42: #{_lambda_.1} parent=1 // pred_check
      _
    $region43: #{_lambda_.1} parent=1 // pred_check_branch
      %595 = sbr.rel (0) target = $region45
    $region44: #{_lambda_.1} parent=1 // pred_region
      %597 = vsyncadd [#allocation4], 0
      %s599 = sshll.u32 [#allocation7], 4
      %s600 = int_to_ptr.vmem [resolvable:$true] %s599
      %s601 = sshll.u32 %s8, 4
      %s602 = int_to_ptr.hbm [resolvable:$true] %s601
      %604 = dma.vmem_to_hbm [thread:$0]  %s600, 16, %s602, [#allocation4]
    $region45: #{_lambda_.1} parent=1 // pred_fallthru
      _
    // Predicated region
    $region46: #{_lambda_.1} parent=1 // pred_check
      _
    $region47: #{_lambda_.1} parent=1 // pred_check_branch
      %606 = sbr.rel (0) target = $region49
    $region48: #{_lambda_.1} parent=1 // pred_region
      %608 = dma.done [#allocation4], 16
    $region49: #{_lambda_.1} parent=1 // pred_fallthru
      _
    %609 = vsyncpa [#allocation3], 1
    %610 = vsyncpa [#allocation6], 1
    %611 = vsyncpa [#allocation4], 1

</llo_original>
